<compile_context>
chip_gen: v6e
topology: v6e:2x2x1
jax: 0.10.0
libtpu: 0.0.40
codegen_flags: <defaults>
</compile_context>

<pallas_src>
from functools import partial

import jax
import jax.numpy as jnp
from jax import lax
from jax.experimental import pallas as pl
from jax.experimental.pallas import tpu as pltpu

# ---- module hyperparameters (in_features depends on synthetic data in the
#      original script; we pick a small deterministic value) ----
HIDDEN_SIZE = 100          # fixed by the PyTorch module
IN_FEATURES = 32           # maxlen * nchannels in the original script (synthetic)
BATCH = 200                # example batch; padded to a tile multiple inside

LANE = 128                 # TPU lane width


def mlp_kernel(x_ref, w1T_ref, bw_ref, b2_ref, o_ref):
    """One batch tile, batch-on-lanes layout.

    x_ref   : [TILE_B, IN_FEATURES]      VMEM (per batch tile, natural layout)
    w1T_ref : [HIDDEN_PAD, IN_FEATURES]  VMEM (grid-invariant)
    bw_ref  : [HIDDEN_PAD, 2]            VMEM (col 0 = b1, col 1 = w2; padded)
    b2_ref  : [1, 1]                     SMEM scalar
    o_ref   : [1, TILE_B]                VMEM lane-dense output row
    """
    # Layer 1 on the MXU, contracting the feature axis of both operands:
    # [H, IN] x [B_tile, IN] -> [H, B_tile], f32 accumulate. The implied
    # transpose of the small x tile is folded into the MXU feed.
    h = lax.dot_general(
        w1T_ref[...], x_ref[...],
        dimension_numbers=(((1,), (1,)), ((), ())),
        preferred_element_type=jnp.float32)
    h = jnp.maximum(h + bw_ref[:, 0:1], 0.0)              # bias + ReLU on the VPU
    # Output layer (hidden -> 1) as VPU multiply + cross-sublane reduce:
    # an N=1 matmul would burn a full MXU pass for a single valid column.
    y = jnp.sum(h * bw_ref[:, 1:2], axis=0, keepdims=True)   # [1, TILE_B]
    o_ref[...] = (y + b2_ref[0, 0]).astype(o_ref.dtype)


def prepare_params(w1, b1, w2, b2):
    """One-time weight prep (hoisted out of the per-call forward path).

    w1: [in, hidden]; b1: [hidden]; w2: [hidden, 1]; b2: [1]
    Returns (w1T [hp, in], bw [hp, 2], b2s [1, 1]) with hidden padded to 128.
    Zero padding of W1 cols / b1 / W2 rows is mathematically inert.
    """
    in_f, hidden = w1.shape
    hp = pl.cdiv(hidden, LANE) * LANE
    w1T = jnp.pad(w1, ((0, 0), (0, hp - hidden))).T                  # [hp, in]
    b1_p = jnp.pad(b1.reshape(hidden), (0, hp - hidden))             # [hp]
    w2_p = jnp.pad(w2.reshape(hidden), (0, hp - hidden))             # [hp]
    bw = jnp.stack([b1_p, w2_p], axis=1).astype(jnp.float32)         # [hp, 2]
    b2s = b2.reshape(1, 1).astype(jnp.float32)                       # SMEM scalar
    return w1T.astype(jnp.float32), bw, b2s


def _default_num_batch_tiles():
    """1 tile on single-TC chips (v5e/v6e); 1 tile per core (2) on v7x."""
    try:
        kind = jax.devices()[0].device_kind.lower()
    except Exception:
        return 1
    return 2 if ("v7" in kind or "7x" in kind) else 1


@partial(jax.jit, static_argnames=("num_batch_tiles",))
def net_forward(x, w1T, bw, b2s, num_batch_tiles=1):
    """x: [B, in_features] f32; prepared params from prepare_params -> [B, 1]."""
    B, in_f = x.shape
    hp = w1T.shape[0]

    # Pad batch so each tile is a multiple of the 128-lane width (lane-dense
    # output stores, unmasked vregs). Only x-side padding lives in the hot path.
    tile_quant = num_batch_tiles * LANE
    bp = pl.cdiv(B, tile_quant) * tile_quant
    tile_b = bp // num_batch_tiles
    x_p = jnp.pad(x, ((0, bp - B), (0, 0)))                          # [bp, in_f]

    out = pl.pallas_call(
        mlp_kernel,
        out_shape=jax.ShapeDtypeStruct((1, bp), jnp.float32),
        grid=(num_batch_tiles,),
        in_specs=[
            pl.BlockSpec((tile_b, in_f), lambda i: (i, 0)),      # x (per batch tile)
            pl.BlockSpec((hp, in_f), lambda i: (0, 0)),          # W1^T (grid-invariant)
            pl.BlockSpec((hp, 2), lambda i: (0, 0)),             # packed [b1 | w2]
            pl.BlockSpec(memory_space=pltpu.MemorySpace.SMEM),   # b2 scalar
        ],
        out_specs=pl.BlockSpec((1, tile_b), lambda i: (0, i)),   # lane-dense output
        compiler_params=pltpu.CompilerParams(
            dimension_semantics=("parallel",)),                  # 2-TC sharding on v7x
    )(x_p, w1T, bw, b2s)

    return out[0, :B][:, None]                                   # back to [B, 1]


def init_params(key):
    """Deterministic PyTorch-style (uniform +/- 1/sqrt(fan_in)) init."""
    k1, k2, k3, k4 = jax.random.split(key, 4)
    bound1 = 1.0 / jnp.sqrt(jnp.float32(IN_FEATURES))
    bound2 = 1.0 / jnp.sqrt(jnp.float32(HIDDEN_SIZE))
    w1 = jax.random.uniform(k1, (IN_FEATURES, HIDDEN_SIZE), jnp.float32,
                            -bound1, bound1)
    b1 = jax.random.uniform(k2, (HIDDEN_SIZE,), jnp.float32, -bound1, bound1)
    w2 = jax.random.uniform(k3, (HIDDEN_SIZE, 1), jnp.float32, -bound2, bound2)
    b2 = jax.random.uniform(k4, (1,), jnp.float32, -bound2, bound2)
    return w1, b1, w2, b2


if __name__ == "__main__":
    key = jax.random.PRNGKey(0)
    kx, kp = jax.random.split(key)
    x = jax.random.normal(kx, (BATCH, IN_FEATURES), jnp.float32)
    w1, b1, w2, b2 = init_params(kp)

    # One-time weight prep (outside the per-call forward path).
    w1T, bw, b2s = prepare_params(w1, b1, w2, b2)
    w1T, bw, b2s = jax.block_until_ready((w1T, bw, b2s))

    num_tiles = _default_num_batch_tiles()
    out = jax.block_until_ready(
        net_forward(x, w1T, bw, b2s, num_batch_tiles=num_tiles))

    # Reference check (plain JAX) — same forward semantics as the PyTorch module.
    ref = jnp.maximum(x @ w1 + b1, 0.0) @ w2 + b2
    assert out.shape == (BATCH, 1)
    assert jnp.allclose(out, ref, atol=1e-4, rtol=1e-4), \
        float(jnp.max(jnp.abs(out - ref)))

    print("KERNEL_OK")
</pallas_src>

<mosaic_0001>
module attributes {stable_mosaic.version = 11 : i64} {
  func.func @mlp_kernel(%arg0: i32, %arg1: memref<256x32xf32, #tpu.memory_space<vmem>>, %arg2: memref<128x32xf32, #tpu.memory_space<vmem>>, %arg3: memref<128x2xf32, #tpu.memory_space<vmem>>, %arg4: memref<1x1xf32, #tpu.memory_space<smem>>, %arg5: memref<1x256xf32, #tpu.memory_space<vmem>>) attributes {dimension_semantics = [#tpu.dimension_semantics<parallel>], iteration_bounds = array<i64: 1>, scalar_prefetch = 0 : i64, scratch_operands = 0 : i64, tpu.core_type = #tpu.core_type<tc>, window_params = [{transform_indices = @transform_0, window_bounds = array<i64: 256, 32>}, {pipeline_mode = #tpu.pipeline_mode<synchronous>, transform_indices = @transform_1, window_bounds = array<i64: 128, 32>}, {pipeline_mode = #tpu.pipeline_mode<synchronous>, transform_indices = @transform_2, window_bounds = array<i64: 128, 2>}, {transform_indices = @transform_3, window_bounds = array<i64: 1, 1>}, {transform_indices = @transform_4, window_bounds = array<i64: 1, 256>}]} {
    %c0 = arith.constant 0 : index
    %c0_0 = arith.constant 0 : index
    %0 = vector.load %arg2[%c0, %c0_0] : memref<128x32xf32, #tpu.memory_space<vmem>>, vector<128x32xf32>
    %c0_1 = arith.constant 0 : index
    %c0_2 = arith.constant 0 : index
    %1 = vector.load %arg1[%c0_1, %c0_2] : memref<256x32xf32, #tpu.memory_space<vmem>>, vector<256x32xf32>
    %cst = arith.constant dense<0.000000e+00> : vector<128x256xf32>
    %2 = tpu.matmul %0, %1, %cst {dimension_numbers = #tpu.dot_dimension_numbers<[1], [1], [0], [0], [0, 0, 1, 0], [], []>} : vector<128x32xf32>, vector<256x32xf32>, vector<128x256xf32> -> vector<128x256xf32>
    %c0_3 = arith.constant 0 : index
    %c0_4 = arith.constant 0 : index
    %3 = vector.load %arg3[%c0_3, %c0_4] : memref<128x2xf32, #tpu.memory_space<vmem>>, vector<128x1xf32>
    %4 = vector.broadcast %3 : vector<128x1xf32> to vector<128x256xf32>
    %5 = arith.addf %2, %4 : vector<128x256xf32>
    %cst_5 = arith.constant 0.000000e+00 : f32
    %6 = vector.broadcast %cst_5 : f32 to vector<128x256xf32>
    %7 = arith.maximumf %5, %6 : vector<128x256xf32>
    %c0_6 = arith.constant 0 : index
    %c1 = arith.constant 1 : index
    %8 = vector.load %arg3[%c0_6, %c1] : memref<128x2xf32, #tpu.memory_space<vmem>>, vector<128x1xf32>
    %9 = vector.broadcast %8 : vector<128x1xf32> to vector<128x256xf32>
    %10 = arith.mulf %7, %9 : vector<128x256xf32>
    %cst_7 = arith.constant dense<0.000000e+00> : vector<256xf32>
    %11 = vector.multi_reduction <add>, %10, %cst_7 [0] : vector<128x256xf32> to vector<256xf32>
    %12 = vector.shape_cast %11 : vector<256xf32> to vector<1x256xf32>
    %c0_8 = arith.constant 0 : index
    %c0_9 = arith.constant 0 : index
    %13 = memref.load %arg4[%c0_8, %c0_9] : memref<1x1xf32, #tpu.memory_space<smem>>
    %14 = vector.broadcast %13 : f32 to vector<1x256xf32>
    %15 = arith.addf %12, %14 : vector<1x256xf32>
    %c0_10 = arith.constant 0 : index
    %c0_11 = arith.constant 0 : index
    %16 = vector.load %arg5[%c0_10, %c0_11] : memref<1x256xf32, #tpu.memory_space<vmem>>, vector<1x256xf32>
    tpu.vector_store %arg5[%c0_10, %c0_11], %15 {strides = array<i32>} : memref<1x256xf32, #tpu.memory_space<vmem>>, vector<1x256xf32>,
    return
  }
  func.func @transform_0(%arg0: i32) -> (i32, i32) {
    %c0_i32 = arith.constant 0 : i32
    %c0_i32_0 = arith.constant 0 : i32
    return %arg0, %c0_i32 : i32, i32
  }
  func.func @transform_1(%arg0: i32) -> (i32, i32) {
    %c0_i32 = arith.constant 0 : i32
    %c0_i32_0 = arith.constant 0 : i32
    %c0_i32_1 = arith.constant 0 : i32
    return %c0_i32, %c0_i32_0 : i32, i32
  }
  func.func @transform_2(%arg0: i32) -> (i32, i32) {
    %c0_i32 = arith.constant 0 : i32
    %c0_i32_0 = arith.constant 0 : i32
    %c0_i32_1 = arith.constant 0 : i32
    return %c0_i32, %c0_i32_0 : i32, i32
  }
  func.func @transform_3(%arg0: i32) -> (i32, i32) {
    %c0_i32 = arith.constant 0 : i32
    %c0_i32_0 = arith.constant 0 : i32
    %c0_i32_1 = arith.constant 0 : i32
    return %c0_i32, %c0_i32_0 : i32, i32
  }
  func.func @transform_4(%arg0: i32) -> (i32, i32) {
    %c0_i32 = arith.constant 0 : i32
    %c0_i32_0 = arith.constant 0 : i32
    return %c0_i32, %arg0 : i32, i32
  }
}

</mosaic_0001>

<llo_original>
// kernel: net_forward.1
$region0: #{net_forward.1}
  #allocation0 [shape = 'u32[]', space=smem, size = 0x4, offset = 0x4, fixed_abs, tag = 'smem constant byte address 0x4 - core index']
  #allocation1 [shape = 'u32[144,128]{1,0:T(1,128)}', space=vmem, size = 0x12000, scoped, tag = 'internal scratch']
  #allocation2 [shape = 'f32[1,1]{1,0:T(1,128)S(6)}', space=smem, size = 0x200, scoped, tag = 'scoped memory for net_forward.1']
  %s0 = inlined_call_operand.vmem [shape: f32[256,32], index: 0, kind: input, shape index: {}]
  %s1 = inlined_call_operand.vmem [shape: f32[128,32], index: 1, kind: input, shape index: {}]
  %s2 = inlined_call_operand.vmem [shape: f32[128,2], index: 2, kind: input, shape index: {}]
  %s3 = inlined_call_operand.<no memory space> [shape: f32[1,1], index: 3, kind: input, shape index: {}]
  %s4 = inlined_call_operand.vmem [shape: f32[1,256], index: 4, kind: output, shape index: {}]
  %s5 = sld [smem:[#allocation0]]
  $region26: #{net_forward.1} parent=0
    _
  %s7 = ssub.s32 1, %s5
  %s8 = scalar_select 0, %s7, %s5
  %9 = sst [smem:[#allocation2]] %s3
  // Predicated region
  $region2: #{net_forward.1} parent=0 // pred_check
    _
  $region3: #{net_forward.1} parent=0 // pred_check_branch
    %11 = sbr.rel (0) target = $region5
  $region4: #{net_forward.1} parent=0 // pred_region
    _
  $region5: #{net_forward.1} parent=0 // pred_fallthru
    _
  // Predicated region
  $region6: #{net_forward.1} parent=0 // pred_check
    _
  $region7: #{net_forward.1} parent=0 // pred_check_branch
    %13 = sbr.rel (0) target = $region9
  $region8: #{net_forward.1} parent=0 // pred_region
    _
  $region9: #{net_forward.1} parent=0 // pred_fallthru
    _
  // Predicated region
  $region10: #{net_forward.1} parent=0 // pred_check
    _
  $region11: #{net_forward.1} parent=0 // pred_check_branch
    %15 = sbr.rel (0) target = $region13
  $region12: #{net_forward.1} parent=0 // pred_region
    _
  $region13: #{net_forward.1} parent=0 // pred_fallthru
    _
  // Predicated region
  $region14: #{net_forward.1} parent=0 // pred_check
    _
  $region15: #{net_forward.1} parent=0 // pred_check_branch
    %17 = sbr.rel (0) target = $region17
  $region16: #{net_forward.1} parent=0 // pred_region
    _
  $region17: #{net_forward.1} parent=0 // pred_fallthru
    _
  %v18 = vld [vmem:[%s1] sm:$0xff]
  %v19 = vld [vmem:[%s1 + $0x8] sm:$0xff]
  %v20 = vld [vmem:[%s1 + $0x10] sm:$0xff]
  %v21 = vld [vmem:[%s1 + $0x18] sm:$0xff]
  %v22 = vld [vmem:[%s1 + $0x20] sm:$0xff]
  %v23 = vld [vmem:[%s1 + $0x28] sm:$0xff]
  %v24 = vld [vmem:[%s1 + $0x30] sm:$0xff]
  %v25 = vld [vmem:[%s1 + $0x38] sm:$0xff]
  %v26 = vld [vmem:[%s1 + $0x40] sm:$0xff]
  %v27 = vld [vmem:[%s1 + $0x48] sm:$0xff]
  %v28 = vld [vmem:[%s1 + $0x50] sm:$0xff]
  %v29 = vld [vmem:[%s1 + $0x58] sm:$0xff]
  %v30 = vld [vmem:[%s1 + $0x60] sm:$0xff]
  %v31 = vld [vmem:[%s1 + $0x68] sm:$0xff]
  %v32 = vld [vmem:[%s1 + $0x70] sm:$0xff]
  %v33 = vld [vmem:[%s1 + $0x78] sm:$0xff]
  %v34 = vld [vmem:[%s0] sm:$0xff]
  %v35 = vld [vmem:[%s0 + $0x8] sm:$0xff]
  %v36 = vld [vmem:[%s0 + $0x10] sm:$0xff]
  %v37 = vld [vmem:[%s0 + $0x18] sm:$0xff]
  %v38 = vld [vmem:[%s0 + $0x20] sm:$0xff]
  %v39 = vld [vmem:[%s0 + $0x28] sm:$0xff]
  %v40 = vld [vmem:[%s0 + $0x30] sm:$0xff]
  %v41 = vld [vmem:[%s0 + $0x38] sm:$0xff]
  %v42 = vld [vmem:[%s0 + $0x40] sm:$0xff]
  %v43 = vld [vmem:[%s0 + $0x48] sm:$0xff]
  %v44 = vld [vmem:[%s0 + $0x50] sm:$0xff]
  %v45 = vld [vmem:[%s0 + $0x58] sm:$0xff]
  %v46 = vld [vmem:[%s0 + $0x60] sm:$0xff]
  %v47 = vld [vmem:[%s0 + $0x68] sm:$0xff]
  %v48 = vld [vmem:[%s0 + $0x70] sm:$0xff]
  %v49 = vld [vmem:[%s0 + $0x78] sm:$0xff]
  %v50 = vld [vmem:[%s0 + $0x80] sm:$0xff]
  %v51 = vld [vmem:[%s0 + $0x88] sm:$0xff]
  %v52 = vld [vmem:[%s0 + $0x90] sm:$0xff]
  %v53 = vld [vmem:[%s0 + $0x98] sm:$0xff]
  %v54 = vld [vmem:[%s0 + $0xa0] sm:$0xff]
  %v55 = vld [vmem:[%s0 + $0xa8] sm:$0xff]
  %v56 = vld [vmem:[%s0 + $0xb0] sm:$0xff]
  %v57 = vld [vmem:[%s0 + $0xb8] sm:$0xff]
  %v58 = vld [vmem:[%s0 + $0xc0] sm:$0xff]
  %v59 = vld [vmem:[%s0 + $0xc8] sm:$0xff]
  %v60 = vld [vmem:[%s0 + $0xd0] sm:$0xff]
  %v61 = vld [vmem:[%s0 + $0xd8] sm:$0xff]
  %v62 = vld [vmem:[%s0 + $0xe0] sm:$0xff]
  %v63 = vld [vmem:[%s0 + $0xe8] sm:$0xff]
  %v64 = vld [vmem:[%s0 + $0xf0] sm:$0xff]
  %v65 = vld [vmem:[%s0 + $0xf8] sm:$0xff]
  %v66 = vld [vmem:[%s2] sm:$0xff]
  %v67 = vld [vmem:[%s2 + $0x8] sm:$0xff]
  %v68 = vld [vmem:[%s2 + $0x10] sm:$0xff]
  %v69 = vld [vmem:[%s2 + $0x18] sm:$0xff]
  %v70 = vld [vmem:[%s2 + $0x20] sm:$0xff]
  %v71 = vld [vmem:[%s2 + $0x28] sm:$0xff]
  %v72 = vld [vmem:[%s2 + $0x30] sm:$0xff]
  %v73 = vld [vmem:[%s2 + $0x38] sm:$0xff]
  %v74 = vld [vmem:[%s2 + $0x40] sm:$0xff]
  %v75 = vld [vmem:[%s2 + $0x48] sm:$0xff]
  %v76 = vld [vmem:[%s2 + $0x50] sm:$0xff]
  %v77 = vld [vmem:[%s2 + $0x58] sm:$0xff]
  %v78 = vld [vmem:[%s2 + $0x60] sm:$0xff]
  %v79 = vld [vmem:[%s2 + $0x68] sm:$0xff]
  %v80 = vld [vmem:[%s2 + $0x70] sm:$0xff]
  %v81 = vld [vmem:[%s2 + $0x78] sm:$0xff]
  %83 = vset.pattern.permute.xlu0 0
  %84 = vperm.xlu0 %83, %v66
  %v85 = vpop.permute.xlu0 %84
  %88 = vset.pattern.permute.xlu0 0
  %89 = vperm.xlu0 %88, %v67
  %v90 = vpop.permute.xlu0 %89
  %93 = vset.pattern.permute.xlu0 0
  %94 = vperm.xlu0 %93, %v68
  %v95 = vpop.permute.xlu0 %94
  %98 = vset.pattern.permute.xlu0 0
  %99 = vperm.xlu0 %98, %v69
  %v100 = vpop.permute.xlu0 %99
  %103 = vset.pattern.permute.xlu0 0
  %104 = vperm.xlu0 %103, %v70
  %v105 = vpop.permute.xlu0 %104
  %108 = vset.pattern.permute.xlu0 0
  %109 = vperm.xlu0 %108, %v71
  %v110 = vpop.permute.xlu0 %109
  %113 = vset.pattern.permute.xlu0 0
  %114 = vperm.xlu0 %113, %v72
  %v115 = vpop.permute.xlu0 %114
  %118 = vset.pattern.permute.xlu0 0
  %119 = vperm.xlu0 %118, %v73
  %v120 = vpop.permute.xlu0 %119
  %123 = vset.pattern.permute.xlu0 0
  %124 = vperm.xlu0 %123, %v74
  %v125 = vpop.permute.xlu0 %124
  %128 = vset.pattern.permute.xlu0 0
  %129 = vperm.xlu0 %128, %v75
  %v130 = vpop.permute.xlu0 %129
  %133 = vset.pattern.permute.xlu0 0
  %134 = vperm.xlu0 %133, %v76
  %v135 = vpop.permute.xlu0 %134
  %138 = vset.pattern.permute.xlu0 0
  %139 = vperm.xlu0 %138, %v77
  %v140 = vpop.permute.xlu0 %139
  %143 = vset.pattern.permute.xlu0 0
  %144 = vperm.xlu0 %143, %v78
  %v145 = vpop.permute.xlu0 %144
  %148 = vset.pattern.permute.xlu0 0
  %149 = vperm.xlu0 %148, %v79
  %v150 = vpop.permute.xlu0 %149
  %153 = vset.pattern.permute.xlu0 0
  %154 = vperm.xlu0 %153, %v80
  %v155 = vpop.permute.xlu0 %154
  %158 = vset.pattern.permute.xlu0 0
  %159 = vperm.xlu0 %158, %v81
  %v160 = vpop.permute.xlu0 %159
  %vm162 = vcmask 261120
  %v164 = vsel %vm162, %v18, 0
  %v167 = vsel %vm162, %v19, 0
  %v170 = vsel %vm162, %v20, 0
  %v173 = vsel %vm162, %v21, 0
  %v176 = vsel %vm162, %v22, 0
  %v179 = vsel %vm162, %v23, 0
  %v182 = vsel %vm162, %v24, 0
  %v185 = vsel %vm162, %v25, 0
  %v188 = vsel %vm162, %v26, 0
  %v191 = vsel %vm162, %v27, 0
  %v194 = vsel %vm162, %v28, 0
  %v197 = vsel %vm162, %v29, 0
  %v200 = vsel %vm162, %v30, 0
  %v203 = vsel %vm162, %v31, 0
  %v206 = vsel %vm162, %v32, 0
  %v209 = vsel %vm162, %v33, 0
  %v212 = vsel %vm162, %v34, 0
  %v215 = vsel %vm162, %v35, 0
  %v218 = vsel %vm162, %v36, 0
  %v221 = vsel %vm162, %v37, 0
  %v224 = vsel %vm162, %v38, 0
  %v227 = vsel %vm162, %v39, 0
  %v230 = vsel %vm162, %v40, 0
  %v233 = vsel %vm162, %v41, 0
  %v236 = vsel %vm162, %v42, 0
  %v239 = vsel %vm162, %v43, 0
  %v242 = vsel %vm162, %v44, 0
  %v245 = vsel %vm162, %v45, 0
  %v248 = vsel %vm162, %v46, 0
  %v251 = vsel %vm162, %v47, 0
  %v254 = vsel %vm162, %v48, 0
  %v257 = vsel %vm162, %v49, 0
  %v260 = vsel %vm162, %v50, 0
  %v263 = vsel %vm162, %v51, 0
  %v266 = vsel %vm162, %v52, 0
  %v269 = vsel %vm162, %v53, 0
  %v272 = vsel %vm162, %v54, 0
  %v275 = vsel %vm162, %v55, 0
  %v278 = vsel %vm162, %v56, 0
  %v281 = vsel %vm162, %v57, 0
  %v284 = vsel %vm162, %v58, 0
  %v287 = vsel %vm162, %v59, 0
  %v290 = vsel %vm162, %v60, 0
  %v293 = vsel %vm162, %v61, 0
  %v296 = vsel %vm162, %v62, 0
  %v299 = vsel %vm162, %v63, 0
  %v302 = vsel %vm162, %v64, 0
  %v305 = vsel %vm162, %v65, 0
  %307 = vmatprep.subr.mxu0 0.0
  %308 = vmatpush1.xpose.msra.mxu0 %v257
  %309 = vmatprep.subr.mxu0 0.0
  %310 = vmatpush1.xpose.msra.mxu0 %v254
  %311 = vmatprep.subr.mxu0 0.0
  %312 = vmatpush1.xpose.msra.mxu0 %v251
  %313 = vmatprep.subr.mxu0 0.0
  %314 = vmatpush1.xpose.msra.mxu0 %v248
  %315 = vmatprep.subr.mxu0 0.0
  %316 = vmatpush1.xpose.msra.mxu0 %v245
  %317 = vmatprep.subr.mxu0 0.0
  %318 = vmatpush1.xpose.msra.mxu0 %v242
  %319 = vmatprep.subr.mxu0 0.0
  %320 = vmatpush1.xpose.msra.mxu0 %v239
  %321 = vmatprep.subr.mxu0 0.0
  %322 = vmatpush1.xpose.msra.mxu0 %v236
  %323 = vmatprep.subr.mxu0 0.0
  %324 = vmatpush1.xpose.msra.mxu0 %v233
  %325 = vmatprep.subr.mxu0 0.0
  %326 = vmatpush1.xpose.msra.mxu0 %v230
  %327 = vmatprep.subr.mxu0 0.0
  %328 = vmatpush1.xpose.msra.mxu0 %v227
  %329 = vmatprep.subr.mxu0 0.0
  %330 = vmatpush1.xpose.msra.mxu0 %v224
  %331 = vmatprep.subr.mxu0 0.0
  %332 = vmatpush1.xpose.msra.mxu0 %v221
  %333 = vmatprep.subr.mxu0 0.0
  %334 = vmatpush1.xpose.msra.mxu0 %v218
  %335 = vmatprep.subr.mxu0 0.0
  %336 = vmatpush1.xpose.msra.mxu0 %v215
  %337 = vmatprep.subr.mxu0 0.0
  %338 = vmatpush1.xpose.msra.mxu0 %v212
  %339 = vmatprep.subr.mxu0 0.0
  %340 = vmatpush2.xpose.msra.mxu0 %v305
  %341 = vmatprep.subr.mxu0 0.0
  %342 = vmatpush2.xpose.msra.mxu0 %v302
  %343 = vmatprep.subr.mxu0 0.0
  %344 = vmatpush2.xpose.msra.mxu0 %v299
  %345 = vmatprep.subr.mxu0 0.0
  %346 = vmatpush2.xpose.msra.mxu0 %v296
  %347 = vmatprep.subr.mxu0 0.0
  %348 = vmatpush2.xpose.msra.mxu0 %v293
  %349 = vmatprep.subr.mxu0 0.0
  %350 = vmatpush2.xpose.msra.mxu0 %v290
  %351 = vmatprep.subr.mxu0 0.0
  %352 = vmatpush2.xpose.msra.mxu0 %v287
  %353 = vmatprep.subr.mxu0 0.0
  %354 = vmatpush2.xpose.msra.mxu0 %v284
  %355 = vmatprep.subr.mxu0 0.0
  %356 = vmatpush2.xpose.msra.mxu0 %v281
  %357 = vmatprep.subr.mxu0 0.0
  %358 = vmatpush2.xpose.msra.mxu0 %v278
  %359 = vmatprep.subr.mxu0 0.0
  %360 = vmatpush2.xpose.msra.mxu0 %v275
  %361 = vmatprep.subr.mxu0 0.0
  %362 = vmatpush2.xpose.msra.mxu0 %v272
  %363 = vmatprep.subr.mxu0 0.0
  %364 = vmatpush2.xpose.msra.mxu0 %v269
  %365 = vmatprep.subr.mxu0 0.0
  %366 = vmatpush2.xpose.msra.mxu0 %v266
  %367 = vmatprep.subr.mxu0 0.0
  %368 = vmatpush2.xpose.msra.mxu0 %v263
  %369 = vmatprep.subr.mxu0 0.0
  %370 = vmatpush2.xpose.msra.mxu0 %v260
  %371 = vmatprep.mubr.f32.mxu0 0.0
  %372 = vmatmul.mubr.f32.gmra.mxu0 %v164
  %v373 = vpop.f32.mrf.mxu0
  %v374 = vadd.f32 %v85, %v373
  %v375 = vpop.f32.mrf.mxu0
  %v376 = vadd.f32 %v85, %v375
  %377 = vmatprep.mubr.f32.mxu0 0.0
  %378 = vmatmul.mubr.f32.gmra.mxu0 %v167
  %v379 = vpop.f32.mrf.mxu0
  %v380 = vadd.f32 %v90, %v379
  %v381 = vpop.f32.mrf.mxu0
  %v382 = vadd.f32 %v90, %v381
  %383 = vmatprep.mubr.f32.mxu0 0.0
  %384 = vmatmul.mubr.f32.gmra.mxu0 %v170
  %v385 = vpop.f32.mrf.mxu0
  %v386 = vadd.f32 %v95, %v385
  %v387 = vpop.f32.mrf.mxu0
  %v388 = vadd.f32 %v95, %v387
  %389 = vmatprep.mubr.f32.mxu0 0.0
  %390 = vmatmul.mubr.f32.gmra.mxu0 %v173
  %v391 = vpop.f32.mrf.mxu0
  %v392 = vadd.f32 %v100, %v391
  %v393 = vpop.f32.mrf.mxu0
  %v394 = vadd.f32 %v100, %v393
  %395 = vmatprep.mubr.f32.mxu0 0.0
  %396 = vmatmul.mubr.f32.gmra.mxu0 %v176
  %v397 = vpop.f32.mrf.mxu0
  %v398 = vadd.f32 %v105, %v397
  %v399 = vpop.f32.mrf.mxu0
  %v400 = vadd.f32 %v105, %v399
  %401 = vmatprep.mubr.f32.mxu0 0.0
  %402 = vmatmul.mubr.f32.gmra.mxu0 %v179
  %v403 = vpop.f32.mrf.mxu0
  %v404 = vadd.f32 %v110, %v403
  %v405 = vpop.f32.mrf.mxu0
  %v406 = vadd.f32 %v110, %v405
  %407 = vmatprep.mubr.f32.mxu0 0.0
  %408 = vmatmul.mubr.f32.gmra.mxu0 %v182
  %v409 = vpop.f32.mrf.mxu0
  %v410 = vadd.f32 %v115, %v409
  %v411 = vpop.f32.mrf.mxu0
  %v412 = vadd.f32 %v115, %v411
  %413 = vmatprep.mubr.f32.mxu0 0.0
  %414 = vmatmul.mubr.f32.gmra.mxu0 %v185
  %v415 = vpop.f32.mrf.mxu0
  %v416 = vadd.f32 %v120, %v415
  %v417 = vpop.f32.mrf.mxu0
  %v418 = vadd.f32 %v120, %v417
  %419 = vmatprep.mubr.f32.mxu0 0.0
  %420 = vmatmul.mubr.f32.gmra.mxu0 %v188
  %v421 = vpop.f32.mrf.mxu0
  %v422 = vadd.f32 %v125, %v421
  %v423 = vpop.f32.mrf.mxu0
  %v424 = vadd.f32 %v125, %v423
  %425 = vmatprep.mubr.f32.mxu0 0.0
  %426 = vmatmul.mubr.f32.gmra.mxu0 %v191
  %v427 = vpop.f32.mrf.mxu0
  %v428 = vadd.f32 %v130, %v427
  %v429 = vpop.f32.mrf.mxu0
  %v430 = vadd.f32 %v130, %v429
  %431 = vmatprep.mubr.f32.mxu0 0.0
  %432 = vmatmul.mubr.f32.gmra.mxu0 %v194
  %v433 = vpop.f32.mrf.mxu0
  %v434 = vadd.f32 %v135, %v433
  %v435 = vpop.f32.mrf.mxu0
  %v436 = vadd.f32 %v135, %v435
  %437 = vmatprep.mubr.f32.mxu0 0.0
  %438 = vmatmul.mubr.f32.gmra.mxu0 %v197
  %v439 = vpop.f32.mrf.mxu0
  %v440 = vadd.f32 %v140, %v439
  %v441 = vpop.f32.mrf.mxu0
  %v442 = vadd.f32 %v140, %v441
  %443 = vmatprep.mubr.f32.mxu0 0.0
  %444 = vmatmul.mubr.f32.gmra.mxu0 %v200
  %v445 = vpop.f32.mrf.mxu0
  %v446 = vadd.f32 %v145, %v445
  %v447 = vpop.f32.mrf.mxu0
  %v448 = vadd.f32 %v145, %v447
  %449 = vmatprep.mubr.f32.mxu0 0.0
  %450 = vmatmul.mubr.f32.gmra.mxu0 %v203
  %v451 = vpop.f32.mrf.mxu0
  %v452 = vadd.f32 %v150, %v451
  %v453 = vpop.f32.mrf.mxu0
  %v454 = vadd.f32 %v150, %v453
  %455 = vmatprep.mubr.f32.mxu0 0.0
  %456 = vmatmul.mubr.f32.gmra.mxu0 %v206
  %v457 = vpop.f32.mrf.mxu0
  %v458 = vadd.f32 %v155, %v457
  %v459 = vpop.f32.mrf.mxu0
  %v460 = vadd.f32 %v155, %v459
  %461 = vmatprep.mubr.f32.mxu0 0.0
  %462 = vmatmul.mubr.f32.gmra.mxu0 %v209
  %v463 = vpop.f32.mrf.mxu0
  %v464 = vadd.f32 %v160, %v463
  %v465 = vpop.f32.mrf.mxu0
  %v466 = vadd.f32 %v160, %v465
  %467 = vdwg.mxu0
  %v468 = vmax.f32 %v374, 0.0
  %v469 = vmax.f32 %v376, 0.0
  %v470 = vmax.f32 %v380, 0.0
  %v471 = vmax.f32 %v382, 0.0
  %v472 = vmax.f32 %v386, 0.0
  %v473 = vmax.f32 %v388, 0.0
  %v474 = vmax.f32 %v392, 0.0
  %v475 = vmax.f32 %v394, 0.0
  %v476 = vmax.f32 %v398, 0.0
  %v477 = vmax.f32 %v400, 0.0
  %v478 = vmax.f32 %v404, 0.0
  %v479 = vmax.f32 %v406, 0.0
  %v480 = vmax.f32 %v410, 0.0
  %v481 = vmax.f32 %v412, 0.0
  %v482 = vmax.f32 %v416, 0.0
  %v483 = vmax.f32 %v418, 0.0
  %v484 = vmax.f32 %v422, 0.0
  %v485 = vmax.f32 %v424, 0.0
  %v486 = vmax.f32 %v428, 0.0
  %v487 = vmax.f32 %v430, 0.0
  %v488 = vmax.f32 %v434, 0.0
  %v489 = vmax.f32 %v436, 0.0
  %v490 = vmax.f32 %v440, 0.0
  %v491 = vmax.f32 %v442, 0.0
  %v492 = vmax.f32 %v446, 0.0
  %v493 = vmax.f32 %v448, 0.0
  %v494 = vmax.f32 %v452, 0.0
  %v495 = vmax.f32 %v454, 0.0
  %v496 = vmax.f32 %v458, 0.0
  %v497 = vmax.f32 %v460, 0.0
  %v498 = vmax.f32 %v464, 0.0
  %v499 = vmax.f32 %v466, 0.0
  %500 = vset.pattern.permute.xlu0 1
  %501 = vperm.xlu0 %500, %v66
  %v502 = vpop.permute.xlu0 %501
  %504 = vset.pattern.permute.xlu0 1
  %505 = vperm.xlu0 %504, %v67
  %v506 = vpop.permute.xlu0 %505
  %508 = vset.pattern.permute.xlu0 1
  %509 = vperm.xlu0 %508, %v68
  %v510 = vpop.permute.xlu0 %509
  %512 = vset.pattern.permute.xlu0 1
  %513 = vperm.xlu0 %512, %v69
  %v514 = vpop.permute.xlu0 %513
  %516 = vset.pattern.permute.xlu0 1
  %517 = vperm.xlu0 %516, %v70
  %v518 = vpop.permute.xlu0 %517
  %520 = vset.pattern.permute.xlu0 1
  %521 = vperm.xlu0 %520, %v71
  %v522 = vpop.permute.xlu0 %521
  %524 = vset.pattern.permute.xlu0 1
  %525 = vperm.xlu0 %524, %v72
  %v526 = vpop.permute.xlu0 %525
  %528 = vset.pattern.permute.xlu0 1
  %529 = vperm.xlu0 %528, %v73
  %v530 = vpop.permute.xlu0 %529
  %532 = vset.pattern.permute.xlu0 1
  %533 = vperm.xlu0 %532, %v74
  %v534 = vpop.permute.xlu0 %533
  %536 = vset.pattern.permute.xlu0 1
  %537 = vperm.xlu0 %536, %v75
  %v538 = vpop.permute.xlu0 %537
  %540 = vset.pattern.permute.xlu0 1
  %541 = vperm.xlu0 %540, %v76
  %v542 = vpop.permute.xlu0 %541
  %544 = vset.pattern.permute.xlu0 1
  %545 = vperm.xlu0 %544, %v77
  %v546 = vpop.permute.xlu0 %545
  %548 = vset.pattern.permute.xlu0 1
  %549 = vperm.xlu0 %548, %v78
  %v550 = vpop.permute.xlu0 %549
  %552 = vset.pattern.permute.xlu0 1
  %553 = vperm.xlu0 %552, %v79
  %v554 = vpop.permute.xlu0 %553
  %556 = vset.pattern.permute.xlu0 1
  %557 = vperm.xlu0 %556, %v80
  %v558 = vpop.permute.xlu0 %557
  %560 = vset.pattern.permute.xlu0 1
  %561 = vperm.xlu0 %560, %v81
  %v562 = vpop.permute.xlu0 %561
  %v564 = vmul.f32 %v468, %v502
  %v565 = vmul.f32 %v469, %v502
  %v566 = vmul.f32 %v470, %v506
  %v567 = vmul.f32 %v471, %v506
  %v568 = vmul.f32 %v472, %v510
  %v569 = vmul.f32 %v473, %v510
  %v570 = vmul.f32 %v474, %v514
  %v571 = vmul.f32 %v475, %v514
  %v572 = vmul.f32 %v476, %v518
  %v573 = vmul.f32 %v477, %v518
  %v574 = vmul.f32 %v478, %v522
  %v575 = vmul.f32 %v479, %v522
  %v576 = vmul.f32 %v480, %v526
  %v577 = vmul.f32 %v481, %v526
  %v578 = vmul.f32 %v482, %v530
  %v579 = vmul.f32 %v483, %v530
  %v580 = vmul.f32 %v484, %v534
  %v581 = vmul.f32 %v485, %v534
  %v582 = vmul.f32 %v486, %v538
  %v583 = vmul.f32 %v487, %v538
  %v584 = vmul.f32 %v488, %v542
  %v585 = vmul.f32 %v489, %v542
  %v586 = vmul.f32 %v490, %v546
  %v587 = vmul.f32 %v491, %v546
  %v588 = vmul.f32 %v492, %v550
  %v589 = vmul.f32 %v493, %v550
  %v590 = vmul.f32 %v494, %v554
  %v591 = vmul.f32 %v495, %v554
  %v592 = vmul.f32 %v496, %v558
  %v593 = vmul.f32 %v497, %v558
  %v594 = vmul.f32 %v498, %v562
  %v595 = vmul.f32 %v499, %v562
  %v596 = vadd.f32 %v564, %v566
  %v597 = vadd.f32 %v596, %v568
  %v598 = vadd.f32 %v597, %v570
  %v599 = vadd.f32 %v598, %v572
  %v600 = vadd.f32 %v599, %v574
  %v601 = vadd.f32 %v600, %v576
  %v602 = vadd.f32 %v601, %v578
  %v603 = vadd.f32 %v602, %v580
  %v604 = vadd.f32 %v603, %v582
  %v605 = vadd.f32 %v604, %v584
  %v606 = vadd.f32 %v605, %v586
  %v607 = vadd.f32 %v606, %v588
  %v608 = vadd.f32 %v607, %v590
  %v609 = vadd.f32 %v608, %v592
  %v610 = vadd.f32 %v609, %v594
  %v611 = vrot.slane %v610, 4
  %v612 = vadd.f32 %v610, %v611
  %v613 = vrot.slane %v612, 2
  %v614 = vadd.f32 %v612, %v613
  %v615 = vrot.slane %v614, 1
  %v616 = vadd.f32 %v614, %v615
  %v617 = vadd.f32 %v565, %v567
  %v618 = vadd.f32 %v617, %v569
  %v619 = vadd.f32 %v618, %v571
  %v620 = vadd.f32 %v619, %v573
  %v621 = vadd.f32 %v620, %v575
  %v622 = vadd.f32 %v621, %v577
  %v623 = vadd.f32 %v622, %v579
  %v624 = vadd.f32 %v623, %v581
  %v625 = vadd.f32 %v624, %v583
  %v626 = vadd.f32 %v625, %v585
  %v627 = vadd.f32 %v626, %v587
  %v628 = vadd.f32 %v627, %v589
  %v629 = vadd.f32 %v628, %v591
  %v630 = vadd.f32 %v629, %v593
  %v631 = vadd.f32 %v630, %v595
  %v632 = vrot.slane %v631, 4
  %v633 = vadd.f32 %v631, %v632
  %v634 = vrot.slane %v633, 2
  %v635 = vadd.f32 %v633, %v634
  %v636 = vrot.slane %v635, 1
  %v637 = vadd.f32 %v635, %v636
  %s638 = sld [smem:[#allocation2]]
  %v639 = vstv %s638
  %v640 = vadd.f32 %v616, %v639
  %v641 = vadd.f32 %v637, %v639
  %v644 = vcombine.low %v640, %v641
  %v646 = vunpack.c.l.s4 1966171168
  %v647 = vunpack.c.0.s8 %v646
  %v648 = vlaneseq
  %v649 = vshrl.u32 %v648, 7
  %v650 = vsub.s32 %v647, %v649
  %v651 = vrot.slane %v644, %v650
  %v653 = vunpack.c.l.s4 1966171168
  %v654 = vunpack.c.0.s8 %v653
  %v655 = vlaneseq
  %v656 = vshrl.u32 %v655, 7
  %v657 = vsub.s32 %v654, %v656
  %v658 = vrot.slane %v651, %v657
  %v660 = vlaneseq
  %vm661 = vcmp.ge.s32.totalorder %v660, 0
  %vm662 = vcmp.lt.s32.totalorder %v660, 256
  %vm663 = vmand %vm661, %vm662
  %664 = vst.msk [vmem:[%s4] sm:$0x3] %vm663, %v658
  // Predicated region
  $region18: #{net_forward.1} parent=0 // pred_check
    _
  $region19: #{net_forward.1} parent=0 // pred_check_branch
    %666 = sbr.rel (0) target = $region21
  $region20: #{net_forward.1} parent=0 // pred_region
    _
  $region21: #{net_forward.1} parent=0 // pred_fallthru
    _
  // Predicated region
  $region22: #{net_forward.1} parent=0 // pred_check
    _
  $region23: #{net_forward.1} parent=0 // pred_check_branch
    %668 = sbr.rel (0) target = $region25
  $region24: #{net_forward.1} parent=0 // pred_region
    _
  $region25: #{net_forward.1} parent=0 // pred_fallthru
    _

</llo_original>
